<compile_context>
chip_gen: v7x
topology: tpu7x:2x2x1
jax: 0.10.0
libtpu: 0.0.40
codegen_flags: <defaults>
</compile_context>

<pallas_src>
import jax
import jax.numpy as jnp
from jax.experimental import pallas as pl
from jax.experimental.pallas import tpu as pltpu


# ----------------------------------------------------------------------------
# Pallas kernel: SeqPooler forward, mode='CLS', normalize=False
#   pooled[:, j-tile] = tanh( CLS[B,H] @ W[H, tn] + b[1, tn] )
# ----------------------------------------------------------------------------
def _cls_pool_kernel(cls_ref, w_ref, b_ref, out_ref):
    # cls_ref: (B, H)   f32  (CLS token activations; cast to bf16 here, free)
    # w_ref:   (H, tn)  bf16 (pre-transposed, zero-padded Linear weight tile)
    # b_ref:   (1, tn)  f32
    # out_ref: (B, tn)  f32
    cls_bf = cls_ref[...].astype(jnp.bfloat16)
    y = jnp.dot(cls_bf, w_ref[...], preferred_element_type=jnp.float32)
    y = y + b_ref[...]                     # f32 epilogue (broadcast (1, tn))
    out_ref[...] = jnp.tanh(y).astype(out_ref.dtype)


def _round_up(x, m):
    return ((x + m - 1) // m) * m


def _num_tensorcores():
    """TensorCores a single Pallas program can shard a "parallel" grid axis
    across (megacore).  1 on v5e/v6e; 2 on v4/v5p/v7x.  Heuristic only affects
    performance (grid size), never correctness."""
    try:
        kind = (jax.devices()[0].device_kind or "").lower()
    except Exception:
        return 1
    if "v7" in kind:
        return 2
    if ("v4" in kind or "v5p" in kind) and "lite" not in kind:
        return 2
    return 1


def _vmem_config():
    """Returns (pipeline_buffer_budget_bytes, vmem_limit_bytes)."""
    cap = None
    try:
        cap = getattr(pltpu.get_tpu_info(), "vmem_capacity_bytes", None)
    except Exception:
        cap = None
    if not cap:
        cap = 64 << 20                     # conservative floor (v7x per-TC VMEM)
    cap = int(cap)
    budget = cap // 2                      # kernel pipeline-buffer budget
    limit = min(budget + (8 << 20), (cap * 9) // 10)
    return budget, limit


def _choose_tile_n(B, H, E_pad, num_cores, budget_bytes):
    """Largest lane-dense (128-multiple) tile of the embedding axis such that
    the grid has exactly one block per TensorCore if possible, subject to the
    VMEM budget (double-buffered pipeline accounting)."""

    def step_bytes(tn):
        w = 2 * H * tn * 2                 # bf16 weight tile, double-buffered
        o = 2 * B * tn * 4                 # f32 output tile, double-buffered
        bias = 2 * tn * 4                  # f32 bias tile, double-buffered
        cls_ = 2 * B * H * 4               # f32 CLS block (resident)
        return w + o + bias + cls_

    K = E_pad // 128
    # Tile widths (128-multiples that evenly divide E_pad), largest first.
    options = [k * 128 for k in range(K, 0, -1) if K % k == 0]
    # 1) exactly one block per TensorCore, if it fits VMEM.
    for tn in options:
        if E_pad // tn == num_cores and step_bytes(tn) <= budget_bytes:
            return tn
    # 2) largest tile with at least num_cores blocks that fits.
    for tn in options:
        if E_pad // tn >= num_cores and step_bytes(tn) <= budget_bytes:
            return tn
    # 3) largest tile that fits at all, else minimum width.
    for tn in options:
        if step_bytes(tn) <= budget_bytes:
            return tn
    return 128


def cls_pool(cls_hidden, w_t_pad, b_pad, embed_size):
    """cls_hidden: [B, H] float; w_t_pad: [H, E_pad] bf16; b_pad: [1, E_pad] f32.
    Returns [B, embed_size] f32."""
    B, H = cls_hidden.shape
    E_pad = w_t_pad.shape[1]

    num_cores = _num_tensorcores()
    budget, vmem_limit = _vmem_config()
    tn = _choose_tile_n(B, H, E_pad, num_cores, budget)
    grid = (E_pad // tn,)

    cost = pl.CostEstimate(
        flops=2 * B * H * E_pad,
        transcendentals=B * E_pad,
        bytes_accessed=B * H * 4 + H * E_pad * 2 + E_pad * 4 + B * E_pad * 4,
    )

    out = pl.pallas_call(
        _cls_pool_kernel,
        out_shape=jax.ShapeDtypeStruct((B, E_pad), jnp.float32),
        grid=grid,
        in_specs=[
            pl.BlockSpec((B, H), lambda j: (0, 0)),    # CLS activations (resident)
            pl.BlockSpec((H, tn), lambda j: (0, j)),   # weight tile
            pl.BlockSpec((1, tn), lambda j: (0, j)),   # bias tile
        ],
        out_specs=pl.BlockSpec((B, tn), lambda j: (0, j)),
        compiler_params=pltpu.CompilerParams(
            dimension_semantics=("parallel",),         # dual-TC chips split E
            vmem_limit_bytes=vmem_limit,
        ),
        cost_estimate=cost,
    )(cls_hidden.astype(jnp.float32), w_t_pad, b_pad)

    return out[:, :embed_size]


# ----------------------------------------------------------------------------
# BertEmbed wrapper
# ----------------------------------------------------------------------------
class BertEmbedPallas:
    def __init__(self, vocab_size, hidden_size, embedding_size,
                 padding_id=0, key=None):
        if key is None:
            key = jax.random.PRNGKey(0)
        k_emb, k_w, k_b = jax.random.split(key, 3)

        self.hidden_size = hidden_size
        self.embedding_size = embedding_size
        self.padding_id = padding_id

        # Deterministic synthetic parameters.
        self.embed_table = (jax.random.normal(
            k_emb, (vocab_size, hidden_size), dtype=jnp.float32) * 0.02)
        # nn.Linear(hidden_size, embedding_size): weight [E, H], bias [E]
        self.dense_w = (jax.random.normal(
            k_w, (embedding_size, hidden_size), dtype=jnp.float32) * 0.02)
        self.dense_b = (jax.random.normal(
            k_b, (embedding_size,), dtype=jnp.float32) * 0.02)

        # Kernel-side parameters, prepared once (not per forward call):
        #   - transposed to [H, E], zero-padded to a 128-lane multiple,
        #   - weight in bf16 (MXU input), bias kept in f32 (epilogue).
        E_pad = _round_up(embedding_size, 128)
        w_t = jnp.zeros((hidden_size, E_pad), dtype=jnp.float32)
        w_t = w_t.at[:, :embedding_size].set(self.dense_w.T)
        self._w_t_pad = w_t.astype(jnp.bfloat16)                    # [H, E_pad]
        b = jnp.zeros((1, E_pad), dtype=jnp.float32)
        self._b_pad = b.at[0, :embedding_size].set(self.dense_b)    # [1, E_pad]

    def _bert_cls_stub(self, input_ids, attention_mask):
        # Stand-in for the external `bert` module, restricted to the CLS row
        # that the CLS pooling path consumes: embedding lookup, masked.
        cls_hidden = self.embed_table[input_ids[:, 0]]              # [B, H] f32
        cls_mask = attention_mask[:, 0].astype(cls_hidden.dtype)    # [B]
        return cls_hidden * cls_mask[:, None]                       # [B, H] f32

    def forward(self, input_ids, attention_mask=None):
        if attention_mask is None:
            attention_mask = ~(input_ids == self.padding_id)        # [B, S] bool
        cls_hidden = self._bert_cls_stub(input_ids, attention_mask)  # [B, H]
        # Pooling (mode='CLS', normalize=False) — Pallas hot path.
        return cls_pool(cls_hidden, self._w_t_pad, self._b_pad,
                        self.embedding_size)                        # [B, E]


# ----------------------------------------------------------------------------
# Pure-JAX reference for correctness check (full-precision, full [B,S,H] path)
# ----------------------------------------------------------------------------
def reference_forward(model, input_ids):
    attention_mask = ~(input_ids == model.padding_id)
    hidden = model.embed_table[input_ids]                           # [B, S, H]
    hidden = hidden * attention_mask[..., None].astype(hidden.dtype)
    cls_tok = hidden[:, 0, :]
    pooled = jnp.tanh(cls_tok @ model.dense_w.T + model.dense_b)
    return pooled


if __name__ == "__main__":
    B, S, H, E, V = 2, 8, 32, 64, 50
    key = jax.random.PRNGKey(0)
    k_model, k_ids = jax.random.split(key)

    model = BertEmbedPallas(vocab_size=V, hidden_size=H, embedding_size=E,
                            padding_id=0, key=k_model)

    input_ids = jax.random.randint(k_ids, (B, S), minval=1, maxval=V,
                                   dtype=jnp.int32)
    # Force a couple of padding positions so the mask path is exercised.
    input_ids = input_ids.at[0, -2:].set(0)

    out = model.forward(input_ids)
    out = jax.block_until_ready(out)

    ref = reference_forward(model, input_ids)
    assert out.shape == (B, E), out.shape
    # Kernel feeds the MXU in bf16 (f32 accumulate); allow bf16-level tolerance
    # against the pure-f32 reference.
    assert jnp.allclose(out, ref, atol=2e-3, rtol=1e-2), "mismatch vs reference"

    print("KERNEL_OK")
</pallas_src>

<mosaic_0001>
module attributes {stable_mosaic.version = 11 : i64} {
  func.func @_cls_pool_kernel(%arg0: i32, %arg1: memref<2x32xf32, #tpu.memory_space<vmem>>, %arg2: memref<32x128xbf16, #tpu.memory_space<vmem>>, %arg3: memref<1x128xf32, #tpu.memory_space<vmem>>, %arg4: memref<2x128xf32, #tpu.memory_space<vmem>>) attributes {dimension_semantics = [#tpu.dimension_semantics<parallel>], iteration_bounds = array<i64: 1>, scalar_prefetch = 0 : i64, scratch_operands = 0 : i64, tpu.core_type = #tpu.core_type<tc>, window_params = [{pipeline_mode = #tpu.pipeline_mode<synchronous>, transform_indices = @transform_0, window_bounds = array<i64: 2, 32>}, {transform_indices = @transform_1, window_bounds = array<i64: 32, 128>}, {transform_indices = @transform_2, window_bounds = array<i64: 1, 128>}, {transform_indices = @transform_3, window_bounds = array<i64: 2, 128>}]} {
    %c0 = arith.constant 0 : index
    %c0_0 = arith.constant 0 : index
    %0 = vector.load %arg1[%c0, %c0_0] : memref<2x32xf32, #tpu.memory_space<vmem>>, vector<2x32xf32>
    %1 = arith.truncf %0 : vector<2x32xf32> to vector<2x32xbf16>
    %c0_1 = arith.constant 0 : index
    %c0_2 = arith.constant 0 : index
    %2 = vector.load %arg2[%c0_1, %c0_2] : memref<32x128xbf16, #tpu.memory_space<vmem>>, vector<32x128xbf16>
    %cst = arith.constant dense<0.000000e+00> : vector<2x128xf32>
    %3 = tpu.matmul %1, %2, %cst {dimension_numbers = #tpu.dot_dimension_numbers<[1], [0], [0], [1], [0, 0, 1, 1], [], []>} : vector<2x32xbf16>, vector<32x128xbf16>, vector<2x128xf32> -> vector<2x128xf32>
    %c0_3 = arith.constant 0 : index
    %c0_4 = arith.constant 0 : index
    %4 = vector.load %arg3[%c0_3, %c0_4] : memref<1x128xf32, #tpu.memory_space<vmem>>, vector<1x128xf32>
    %5 = vector.broadcast %4 : vector<1x128xf32> to vector<2x128xf32>
    %6 = arith.addf %3, %5 : vector<2x128xf32>
    %7 = math.tanh %6 : vector<2x128xf32>
    %c0_5 = arith.constant 0 : index
    %c0_6 = arith.constant 0 : index
    %8 = vector.load %arg4[%c0_5, %c0_6] : memref<2x128xf32, #tpu.memory_space<vmem>>, vector<2x128xf32>
    tpu.vector_store %arg4[%c0_5, %c0_6], %7 {strides = array<i32>} : memref<2x128xf32, #tpu.memory_space<vmem>>, vector<2x128xf32>,
    return
  }
  func.func @transform_0(%arg0: i32) -> (i32, i32) {
    %c0_i32 = arith.constant 0 : i32
    %c0_i32_0 = arith.constant 0 : i32
    %c0_i32_1 = arith.constant 0 : i32
    return %c0_i32, %c0_i32_0 : i32, i32
  }
  func.func @transform_1(%arg0: i32) -> (i32, i32) {
    %c0_i32 = arith.constant 0 : i32
    %c0_i32_0 = arith.constant 0 : i32
    return %c0_i32, %arg0 : i32, i32
  }
  func.func @transform_2(%arg0: i32) -> (i32, i32) {
    %c0_i32 = arith.constant 0 : i32
    %c0_i32_0 = arith.constant 0 : i32
    return %c0_i32, %arg0 : i32, i32
  }
  func.func @transform_3(%arg0: i32) -> (i32, i32) {
    %c0_i32 = arith.constant 0 : i32
    %c0_i32_0 = arith.constant 0 : i32
    return %c0_i32, %arg0 : i32, i32
  }
}

</mosaic_0001>

<llo_original>
// kernel: tpu_custom_call.1
$region0: #{tpu_custom_call.1}
  #allocation0 [shape = 'u32[]', space=smem, size = 0x4, offset = 0x4, fixed_abs, tag = 'smem constant byte address 0x4 - core index']
  #allocation1 [shape = 'u32[144,128]{1,0:T(1,128)}', space=vmem, size = 0x12000, scoped, tag = 'internal scratch']
  %s0 = inlined_call_operand.hbm [shape: f32[2,32], index: 0, kind: input, shape index: {}]
  %s1 = inlined_call_operand.hbm [shape: bf16[32,128], index: 1, kind: input, shape index: {}]
  %s2 = inlined_call_operand.vmem [shape: f32[1,128], index: 2, kind: input, shape index: {}]
  %s3 = inlined_call_operand.hbm [shape: f32[2,128], index: 3, kind: output, shape index: {}]
  %s4 = sld [smem:[#allocation0]]
  $region30: #{tpu_custom_call.1} parent=0
    _
  %s6 = ssub.s32 1, %s4
  %s7 = scalar_select 0, %s6, %s4
  $region1: #{tpu_custom_call.1} parent=0
    #allocation2 [shape = 'u8[1024]{0}', space=vmem, size = 0x400, scoped, tag = 'input window, operand 0, single buffered']
    #allocation3 [shape = 's32[1]{0}', space=sflag, size = 0x4, scoped, tag = 'scoped memory for tpu_custom_call.1']
    #allocation4 [shape = 's32[1]{0}', space=sflag, size = 0x4, scoped, tag = 'scoped memory for tpu_custom_call.1']
    #allocation5 [shape = 'u8[8192]{0}', space=vmem, size = 0x2000, scoped, tag = 'input window, operand 1, single buffered']
    #allocation6 [shape = 's32[1]{0}', space=sflag, size = 0x4, scoped, tag = 'scoped memory for tpu_custom_call.1']
    #allocation7 [shape = 'u8[1024]{0}', space=vmem, size = 0x400, scoped, tag = 'output window, operand 0, single buffered']
    %8 = vsyncpa [#allocation3], 0
    %9 = vsyncpa [#allocation6], 0
    %10 = vsyncpa [#allocation4], 0
    // Predicated region
    $region2: #{tpu_custom_call.1} parent=1 // pred_check
      _
    $region3: #{tpu_custom_call.1} parent=1 // pred_check_branch
      %12 = sbr.rel (0) target = $region5
    $region4: #{tpu_custom_call.1} parent=1 // pred_region
      %s14 = ssub.s32 32, 32
      %15 = vsyncadd [#allocation3], %s14
      %s17 = sshll.u32 [#allocation2], 4
      %s18 = int_to_ptr.vmem [resolvable:$true] %s17
      %20 = dma.hbm_to_vmem [thread:$0]  %s0, 32, %s18, [#allocation3]
    $region5: #{tpu_custom_call.1} parent=1 // pred_fallthru
      _
    // Predicated region
    $region6: #{tpu_custom_call.1} parent=1 // pred_check
      _
    $region7: #{tpu_custom_call.1} parent=1 // pred_check_branch
      %22 = sbr.rel (0) target = $region9
    $region8: #{tpu_custom_call.1} parent=1 // pred_region
      %s24 = ssub.s32 256, 256
      %25 = vsyncadd [#allocation6], %s24
      %s26 = sshll.u32 [#allocation5], 4
      %s27 = int_to_ptr.vmem [resolvable:$true] %s26
      %32 = dma.hbm_to_vmem [thread:$0]  %s1, 256, %s27, [#allocation6], 64, 64, 4
    $region9: #{tpu_custom_call.1} parent=1 // pred_fallthru
      _
    // Predicated region
    $region10: #{tpu_custom_call.1} parent=1 // pred_check
      _
    $region11: #{tpu_custom_call.1} parent=1 // pred_check_branch
      %34 = sbr.rel (0) target = $region13
    $region12: #{tpu_custom_call.1} parent=1 // pred_region
      _
    $region13: #{tpu_custom_call.1} parent=1 // pred_fallthru
      _
    // Predicated region
    $region14: #{tpu_custom_call.1} parent=1 // pred_check
      _
    $region15: #{tpu_custom_call.1} parent=1 // pred_check_branch
      %36 = sbr.rel (0) target = $region17
    $region16: #{tpu_custom_call.1} parent=1 // pred_region
      %37 = dma.done [#allocation3], 32
    $region17: #{tpu_custom_call.1} parent=1 // pred_fallthru
      _
    // Predicated region
    $region18: #{tpu_custom_call.1} parent=1 // pred_check
      _
    $region19: #{tpu_custom_call.1} parent=1 // pred_check_branch
      %39 = sbr.rel (0) target = $region21
    $region20: #{tpu_custom_call.1} parent=1 // pred_region
      %40 = dma.done [#allocation6], 256
    $region21: #{tpu_custom_call.1} parent=1 // pred_fallthru
      _
    %v42 = vld [vmem:[#allocation2] sm:$0x3]
    %v43 = vpack.c.bf16 %v42, %v42
    %v44 = vld [vmem:[#allocation5] sm:$0xf]
    %v45 = vld [vmem:[#allocation5 + $0x4] sm:$0xf]
    %v46 = vld [vmem:[#allocation5 + $0x8] sm:$0xf]
    %v47 = vld [vmem:[#allocation5 + $0xc] sm:$0xf]
    %v48 = vld [vmem:[%s2] sm:$0x1]
    %v50 = vlaneseq
    %v51 = vshrl.u32 %v50, 7
    %v52 = vsub.s32 0, %v51
    %v53 = vrot.slane %v48, %v52
    %v59 = vunpack.c.l.b16 %v44
    %v60 = vunpack.c.l.b16 %v45
    %v61 = vunpack.c.l.b16 %v46
    %v62 = vunpack.c.l.b16 %v47
    %v63 = vpack.c.b16 %v60, %v59
    %v64 = vpack.c.b16 %v62, %v61
    %vm67 = vcmask 261120
    %v69 = vsel %vm67, %v43, 0
    %71 = vmatprep.subr.bf16.mxu0 0
    %72 = vmatpush1.bf16.msra.mxu0 %v63
    %73 = vmatprep.subr.bf16.mxu0 0
    %74 = vmatpush1.bf16.msra.mxu0 %v64
    %75 = vmatprep.subr.bf16.mxu0 0
    %76 = vmatpush1.bf16.msra.mxu0 0
    %77 = vmatprep.subr.bf16.mxu0 0
    %78 = vmatpush1.bf16.msra.mxu0 0
    %79 = vmatprep.subr.bf16.mxu0 0
    %80 = vmatpush1.bf16.msra.mxu0 0
    %81 = vmatprep.subr.bf16.mxu0 0
    %82 = vmatpush1.bf16.msra.mxu0 0
    %83 = vmatprep.subr.bf16.mxu0 0
    %84 = vmatpush1.bf16.msra.mxu0 0
    %85 = vmatprep.subr.bf16.mxu0 0
    %86 = vmatpush1.bf16.msra.mxu0 0
    %87 = vmatprep.subr.bf16.mxu0 0
    %88 = vmatpush1.bf16.msra.mxu0 0
    %89 = vmatprep.subr.bf16.mxu0 0
    %90 = vmatpush1.bf16.msra.mxu0 0
    %91 = vmatprep.subr.bf16.mxu0 0
    %92 = vmatpush1.bf16.msra.mxu0 0
    %93 = vmatprep.subr.bf16.mxu0 0
    %94 = vmatpush1.bf16.msra.mxu0 0
    %95 = vmatprep.subr.bf16.mxu0 0
    %96 = vmatpush1.bf16.msra.mxu0 0
    %97 = vmatprep.subr.bf16.mxu0 0
    %98 = vmatpush1.bf16.msra.mxu0 0
    %99 = vmatprep.subr.bf16.mxu0 0
    %100 = vmatpush1.bf16.msra.mxu0 0
    %101 = vmatprep.subr.bf16.mxu0 0
    %102 = vmatpush1.bf16.msra.mxu0 0
    %103 = vmatprep.mubr.bf16.mxu0 0
    %104 = vmatmul.mubr.bf16.gmra.mrb[0].mxu0 %v69
    %v105 = vpop.f32.mrb[0].mxu0
    %v106 = vadd.f32 %v53, %v105
    %v107 = vpop.f32.mrb[0].mxu0
    %v108 = vpop.f32.mrb[0].mxu0
    %v109 = vpop.f32.mrb[0].mxu0
    %110 = vdwg.mxu0
    %v111 = vtanh.pop %v106
    %112 = vst [vmem:[#allocation7] sm:$0x3] %v111
    // Predicated region
    $region22: #{tpu_custom_call.1} parent=1 // pred_check
      _
    $region23: #{tpu_custom_call.1} parent=1 // pred_check_branch
      %114 = sbr.rel (0) target = $region25
    $region24: #{tpu_custom_call.1} parent=1 // pred_region
      %s116 = ssub.s32 32, 32
      %117 = vsyncadd [#allocation4], %s116
      %s119 = sshll.u32 [#allocation7], 4
      %s120 = int_to_ptr.vmem [resolvable:$true] %s119
      %122 = dma.vmem_to_hbm [thread:$0]  %s120, 32, %s3, [#allocation4]
    $region25: #{tpu_custom_call.1} parent=1 // pred_fallthru
      _
    // Predicated region
    $region26: #{tpu_custom_call.1} parent=1 // pred_check
      _
    $region27: #{tpu_custom_call.1} parent=1 // pred_check_branch
      %124 = sbr.rel (0) target = $region29
    $region28: #{tpu_custom_call.1} parent=1 // pred_region
      %125 = dma.done [#allocation4], 32
    $region29: #{tpu_custom_call.1} parent=1 // pred_fallthru
      _
    %126 = vsyncpa [#allocation3], 1
    %127 = vsyncpa [#allocation6], 1
    %128 = vsyncpa [#allocation4], 1

</llo_original>
